<compile_context>
chip_gen: v6e
topology: v6e:2x2x1
jax: 0.10.0
libtpu: 0.0.40
codegen_flags: <defaults>
</compile_context>

<pallas_src>
import functools

import jax
import jax.numpy as jnp
from jax.experimental import pallas as pl
from jax.experimental.pallas import tpu as pltpu

LANE = 128
SUBLANE = 8


def _round_up(x, m):
    return ((x + m - 1) // m) * m


# ----------------------------- Pallas kernel ---------------------------------
def _matmul_kernel(a_ref, b_ref, bias_ref, o_ref, acc_ref, *, relu):
    """One (row-tile, k-tile) step of out = act(A @ B + bias).

    grid = (M/tm, K/tk); accumulator lives in VMEM scratch across the k axis.
    Bias add + ReLU are fused into the finalize step (runs once per row tile).
    """
    k = pl.program_id(1)

    @pl.when(k == 0)
    def _init():
        acc_ref[...] = jnp.zeros_like(acc_ref)

    acc_ref[...] += jnp.dot(a_ref[...], b_ref[...],
                            preferred_element_type=jnp.float32)

    @pl.when(k == pl.num_programs(1) - 1)
    def _finalize():
        y = acc_ref[...] + bias_ref[...]          # f32 epilogue on the VPU
        if relu:
            y = jnp.maximum(y, 0.0)
        o_ref[...] = y.astype(o_ref.dtype)


def pallas_matmul(a, b, bias=None, *, relu=False, tm_max=256, tk_max=512):
    """out = act(a @ b + bias).  bf16 MXU operands, f32 accumulation.

    Pads rows to a tile multiple and feature / contraction dims to multiples of 128
    (lane-dense), runs a (row, k) grid with a VMEM accumulator, and slices the
    result back to the logical shape.
    """
    m, k = a.shape
    k2, n = b.shape
    assert k == k2, (a.shape, b.shape)

    # --- derive padded sizes + tile sizes ---
    mp = _round_up(m, SUBLANE)
    tm = min(tm_max, mp)
    mp = _round_up(mp, tm)

    kp = _round_up(k, LANE)
    tk = min(tk_max, kp)
    kp = _round_up(kp, tk)

    np_ = _round_up(n, LANE)

    # --- pad + cast operands (bf16 for the MXU, f32 bias/epilogue) ---
    a_p = jnp.pad(a, ((0, mp - m), (0, kp - k))).astype(jnp.bfloat16)
    b_p = jnp.pad(b, ((0, kp - k), (0, np_ - n))).astype(jnp.bfloat16)
    if bias is None:
        bias_p = jnp.zeros((1, np_), jnp.float32)
    else:
        bias_p = jnp.pad(jnp.reshape(bias, (1, -1)).astype(jnp.float32),
                         ((0, 0), (0, np_ - n)))

    grid = (mp // tm, kp // tk)

    # per-step VMEM footprint: double-buffered inputs/outputs + f32 accumulator
    vmem_bytes = (2 * tm * tk * 2          # A tile (bf16) x2
                  + 2 * tk * np_ * 2       # B tile (bf16) x2
                  + 2 * np_ * 4            # bias    x2
                  + 2 * tm * np_ * 4       # out tile (f32) x2
                  + tm * np_ * 4)          # accumulator
    vmem_limit = max(16 << 20, min(2 * vmem_bytes, 48 << 20))

    out = pl.pallas_call(
        functools.partial(_matmul_kernel, relu=relu),
        out_shape=jax.ShapeDtypeStruct((mp, np_), jnp.float32),
        grid=grid,
        in_specs=[
            pl.BlockSpec((tm, tk), lambda i, kk: (i, kk)),    # A
            pl.BlockSpec((tk, np_), lambda i, kk: (kk, 0)),   # B
            pl.BlockSpec((1, np_), lambda i, kk: (0, 0)),     # bias
        ],
        out_specs=pl.BlockSpec((tm, np_), lambda i, kk: (i, 0)),
        scratch_shapes=[pltpu.VMEM((tm, np_), jnp.float32)],
        compiler_params=pltpu.CompilerParams(
            dimension_semantics=("parallel", "arbitrary"),
            vmem_limit_bytes=int(vmem_limit),
        ),
    )(a_p, b_p, bias_p)

    return out[:m, :n]


# -------------------------- model forward (GraphGNNModel) ---------------------
def graph_gnn_forward(x, a_hat, pool_mat, params):
    w1, b1, w2, b2, wh, bh = params

    # GCNConv #1: relu(A_hat @ (X @ W1) + b1)
    t1 = pallas_matmul(x, w1)
    h = pallas_matmul(a_hat, t1, b1, relu=True)
    # Dropout(0.1): identity at inference

    # GCNConv #2 (c_hidden -> c_hidden): A_hat @ (H @ W2) + b2
    t2 = pallas_matmul(h, w2)
    y = pallas_matmul(a_hat, t2, b2)

    # global_mean_pool(y, batch_idx) == P @ Y with P[g, i] = 1/|graph g| * [batch[i]==g]
    g = pallas_matmul(pool_mat, y)

    # Dropout(0.5): identity at inference; Linear head
    return pallas_matmul(g, wh, bh)


# ----------------------------- plain-JAX glue ---------------------------------
def build_norm_adj(edge_index, num_nodes):
    """Dense A_hat = D^-1/2 (A + I_remaining) D^-1/2, matching PyG gcn_norm
    (add_remaining_self_loops: loops only added to nodes lacking one)."""
    src, dst = edge_index[0], edge_index[1]
    a = jnp.zeros((num_nodes, num_nodes), jnp.float32).at[dst, src].add(1.0)
    diag = jnp.diagonal(a)
    a = a + jnp.diag(jnp.where(diag > 0.0, 0.0, 1.0))
    deg = a.sum(axis=1)
    dinv = jnp.where(deg > 0.0, 1.0 / jnp.sqrt(jnp.maximum(deg, 1e-12)), 0.0)
    return dinv[:, None] * a * dinv[None, :]


def build_pool_matrix(batch_idx, num_graphs):
    """P such that P @ Y == global_mean_pool(Y, batch_idx)."""
    onehot = (batch_idx[None, :] == jnp.arange(num_graphs)[:, None]).astype(jnp.float32)
    counts = onehot.sum(axis=1, keepdims=True)
    return onehot / jnp.maximum(counts, 1.0)


def glorot(key, fan_in, fan_out):
    limit = (6.0 / (fan_in + fan_out)) ** 0.5
    return jax.random.uniform(key, (fan_in, fan_out), jnp.float32, -limit, limit)


def init_params(key, c_in, c_hidden, c_out):
    k1, k2, k3 = jax.random.split(key, 3)
    w1 = glorot(k1, c_in, c_hidden)
    b1 = jnp.zeros((1, c_hidden), jnp.float32)
    w2 = glorot(k2, c_hidden, c_hidden)       # GNN's output dim == c_hidden
    b2 = jnp.zeros((1, c_hidden), jnp.float32)
    wh = glorot(k3, c_hidden, c_out)          # linear head
    bh = jnp.zeros((1, c_out), jnp.float32)
    return w1, b1, w2, b2, wh, bh


# ------------------------------------ main ------------------------------------
if __name__ == "__main__":
    key = jax.random.PRNGKey(0)
    kx, ke, kp = jax.random.split(key, 3)

    N, C_IN, C_HIDDEN, C_OUT, E, G = 8, 4, 32, 3, 16, 2

    # node features [N, c_in], edges [2, E], graph id per node [N]
    x = jax.random.normal(kx, (N, C_IN), jnp.float32)
    edge_index = jax.random.randint(ke, (2, E), 0, N, jnp.int32)
    batch_idx = jnp.repeat(jnp.arange(G, dtype=jnp.int32), N // G)

    params = init_params(kp, C_IN, C_HIDDEN, C_OUT)
    a_hat = build_norm_adj(edge_index, N)
    pool_mat = build_pool_matrix(batch_idx, G)

    fwd = jax.jit(graph_gnn_forward)
    out = fwd(x, a_hat, pool_mat, params)
    out = jax.block_until_ready(out)
    assert out.shape == (G, C_OUT), out.shape

    # pure-JAX reference with the same bf16-operand / f32-accumulation math
    def ref_mm(a, b, bias=None, relu=False):
        y = jnp.dot(a.astype(jnp.bfloat16), b.astype(jnp.bfloat16),
                    preferred_element_type=jnp.float32)
        if bias is not None:
            y = y + bias
        if relu:
            y = jnp.maximum(y, 0.0)
        return y

    w1, b1, w2, b2, wh, bh = params
    rh = ref_mm(a_hat, ref_mm(x, w1), b1, relu=True)
    ry = ref_mm(a_hat, ref_mm(rh, w2), b2)
    rg = ref_mm(pool_mat, ry)
    ro = ref_mm(rg, wh, bh)

    assert jnp.allclose(out, ro, atol=2e-4, rtol=2e-4), (out, ro)
    print("KERNEL_OK")
</pallas_src>

<mosaic_0001>
module attributes {stable_mosaic.version = 11 : i64} {
  func.func @_matmul_kernel(%arg0: i32, %arg1: i32, %arg2: memref<8x128xbf16, #tpu.memory_space<vmem>>, %arg3: memref<128x128xbf16, #tpu.memory_space<vmem>>, %arg4: memref<1x128xf32, #tpu.memory_space<vmem>>, %arg5: memref<8x128xf32, #tpu.memory_space<vmem>>, %arg6: memref<8x128xf32, #tpu.memory_space<vmem>>) attributes {dimension_semantics = [#tpu.dimension_semantics<parallel>, #tpu.dimension_semantics<arbitrary>], iteration_bounds = array<i64: 1, 1>, scalar_prefetch = 0 : i64, scratch_operands = 1 : i64, tpu.core_type = #tpu.core_type<tc>, window_params = [{transform_indices = @transform_0, window_bounds = array<i64: 8, 128>}, {transform_indices = @transform_1, window_bounds = array<i64: 128, 128>}, {pipeline_mode = #tpu.pipeline_mode<synchronous>, transform_indices = @transform_2, window_bounds = array<i64: 1, 128>}, {transform_indices = @transform_3, window_bounds = array<i64: 8, 128>}]} {
    %c0_i32 = arith.constant 0 : i32
    %0 = arith.cmpi eq, %arg1, %c0_i32 : i32
    %1 = arith.extui %0 : i1 to i32
    %c0_i32_0 = arith.constant 0 : i32
    %2 = arith.cmpi ne, %1, %c0_i32_0 : i32
    scf.if %2 {
      %cst_10 = arith.constant 0.000000e+00 : f32
      %12 = vector.broadcast %cst_10 : f32 to vector<8x128xf32>
      %c0_11 = arith.constant 0 : index
      %c0_12 = arith.constant 0 : index
      %13 = vector.load %arg6[%c0_11, %c0_12] : memref<8x128xf32, #tpu.memory_space<vmem>>, vector<8x128xf32>
      tpu.vector_store %arg6[%c0_11, %c0_12], %12 {strides = array<i32>} : memref<8x128xf32, #tpu.memory_space<vmem>>, vector<8x128xf32>,
    } else {
    }
    %c0 = arith.constant 0 : index
    %c0_1 = arith.constant 0 : index
    %3 = vector.load %arg6[%c0, %c0_1] : memref<8x128xf32, #tpu.memory_space<vmem>>, vector<8x128xf32>
    %c0_2 = arith.constant 0 : index
    %c0_3 = arith.constant 0 : index
    %4 = vector.load %arg2[%c0_2, %c0_3] : memref<8x128xbf16, #tpu.memory_space<vmem>>, vector<8x128xbf16>
    %c0_4 = arith.constant 0 : index
    %c0_5 = arith.constant 0 : index
    %5 = vector.load %arg3[%c0_4, %c0_5] : memref<128x128xbf16, #tpu.memory_space<vmem>>, vector<128x128xbf16>
    %cst = arith.constant dense<0.000000e+00> : vector<8x128xf32>
    %6 = tpu.matmul %4, %5, %cst {dimension_numbers = #tpu.dot_dimension_numbers<[1], [0], [0], [1], [0, 0, 1, 1], [], []>} : vector<8x128xbf16>, vector<128x128xbf16>, vector<8x128xf32> -> vector<8x128xf32>
    %7 = arith.addf %3, %6 : vector<8x128xf32>
    %c0_6 = arith.constant 0 : index
    %c0_7 = arith.constant 0 : index
    %8 = vector.load %arg6[%c0_6, %c0_7] : memref<8x128xf32, #tpu.memory_space<vmem>>, vector<8x128xf32>
    tpu.vector_store %arg6[%c0_6, %c0_7], %7 {strides = array<i32>} : memref<8x128xf32, #tpu.memory_space<vmem>>, vector<8x128xf32>,
    %c0_i32_8 = arith.constant 0 : i32
    %9 = arith.cmpi eq, %arg1, %c0_i32_8 : i32
    %10 = arith.extui %9 : i1 to i32
    %c0_i32_9 = arith.constant 0 : i32
    %11 = arith.cmpi ne, %10, %c0_i32_9 : i32
    scf.if %11 {
      %c0_10 = arith.constant 0 : index
      %c0_11 = arith.constant 0 : index
      %12 = vector.load %arg6[%c0_10, %c0_11] : memref<8x128xf32, #tpu.memory_space<vmem>>, vector<8x128xf32>
      %c0_12 = arith.constant 0 : index
      %c0_13 = arith.constant 0 : index
      %13 = vector.load %arg4[%c0_12, %c0_13] : memref<1x128xf32, #tpu.memory_space<vmem>>, vector<1x128xf32>
      %14 = vector.broadcast %13 : vector<1x128xf32> to vector<8x128xf32>
      %15 = arith.addf %12, %14 : vector<8x128xf32>
      %c0_14 = arith.constant 0 : index
      %c0_15 = arith.constant 0 : index
      %16 = vector.load %arg5[%c0_14, %c0_15] : memref<8x128xf32, #tpu.memory_space<vmem>>, vector<8x128xf32>
      tpu.vector_store %arg5[%c0_14, %c0_15], %15 {strides = array<i32>} : memref<8x128xf32, #tpu.memory_space<vmem>>, vector<8x128xf32>,
    } else {
    }
    return
  }
  func.func @transform_0(%arg0: i32, %arg1: i32) -> (i32, i32) {
    %c0_i32 = arith.constant 0 : i32
    return %arg0, %arg1 : i32, i32
  }
  func.func @transform_1(%arg0: i32, %arg1: i32) -> (i32, i32) {
    %c0_i32 = arith.constant 0 : i32
    %c0_i32_0 = arith.constant 0 : i32
    return %arg1, %c0_i32 : i32, i32
  }
  func.func @transform_2(%arg0: i32, %arg1: i32) -> (i32, i32) {
    %c0_i32 = arith.constant 0 : i32
    %c0_i32_0 = arith.constant 0 : i32
    %c0_i32_1 = arith.constant 0 : i32
    return %c0_i32, %c0_i32_0 : i32, i32
  }
  func.func @transform_3(%arg0: i32, %arg1: i32) -> (i32, i32) {
    %c0_i32 = arith.constant 0 : i32
    %c0_i32_0 = arith.constant 0 : i32
    return %arg0, %c0_i32 : i32, i32
  }
}

module attributes {stable_mosaic.version = 11 : i64} {
  func.func @_matmul_kernel(%arg0: i32, %arg1: i32, %arg2: memref<8x128xbf16, #tpu.memory_space<vmem>>, %arg3: memref<128x128xbf16, #tpu.memory_space<vmem>>, %arg4: memref<1x128xf32, #tpu.memory_space<vmem>>, %arg5: memref<8x128xf32, #tpu.memory_space<vmem>>, %arg6: memref<8x128xf32, #tpu.memory_space<vmem>>) attributes {dimension_semantics = [#tpu.dimension_semantics<parallel>, #tpu.dimension_semantics<arbitrary>], iteration_bounds = array<i64: 1, 1>, scalar_prefetch = 0 : i64, scratch_operands = 1 : i64, tpu.core_type = #tpu.core_type<tc>, window_params = [{transform_indices = @transform_0, window_bounds = array<i64: 8, 128>}, {transform_indices = @transform_1, window_bounds = array<i64: 128, 128>}, {pipeline_mode = #tpu.pipeline_mode<synchronous>, transform_indices = @transform_2, window_bounds = array<i64: 1, 128>}, {transform_indices = @transform_3, window_bounds = array<i64: 8, 128>}]} {
    %c0_i32 = arith.constant 0 : i32
    %0 = arith.cmpi eq, %arg1, %c0_i32 : i32
    %1 = arith.extui %0 : i1 to i32
    %c0_i32_0 = arith.constant 0 : i32
    %2 = arith.cmpi ne, %1, %c0_i32_0 : i32
    scf.if %2 {
      %cst_10 = arith.constant 0.000000e+00 : f32
      %12 = vector.broadcast %cst_10 : f32 to vector<8x128xf32>
      %c0_11 = arith.constant 0 : index
      %c0_12 = arith.constant 0 : index
      %13 = vector.load %arg6[%c0_11, %c0_12] : memref<8x128xf32, #tpu.memory_space<vmem>>, vector<8x128xf32>
      tpu.vector_store %arg6[%c0_11, %c0_12], %12 {strides = array<i32>} : memref<8x128xf32, #tpu.memory_space<vmem>>, vector<8x128xf32>,
    } else {
    }
    %c0 = arith.constant 0 : index
    %c0_1 = arith.constant 0 : index
    %3 = vector.load %arg6[%c0, %c0_1] : memref<8x128xf32, #tpu.memory_space<vmem>>, vector<8x128xf32>
    %c0_2 = arith.constant 0 : index
    %c0_3 = arith.constant 0 : index
    %4 = vector.load %arg2[%c0_2, %c0_3] : memref<8x128xbf16, #tpu.memory_space<vmem>>, vector<8x128xbf16>
    %c0_4 = arith.constant 0 : index
    %c0_5 = arith.constant 0 : index
    %5 = vector.load %arg3[%c0_4, %c0_5] : memref<128x128xbf16, #tpu.memory_space<vmem>>, vector<128x128xbf16>
    %cst = arith.constant dense<0.000000e+00> : vector<8x128xf32>
    %6 = tpu.matmul %4, %5, %cst {dimension_numbers = #tpu.dot_dimension_numbers<[1], [0], [0], [1], [0, 0, 1, 1], [], []>} : vector<8x128xbf16>, vector<128x128xbf16>, vector<8x128xf32> -> vector<8x128xf32>
    %7 = arith.addf %3, %6 : vector<8x128xf32>
    %c0_6 = arith.constant 0 : index
    %c0_7 = arith.constant 0 : index
    %8 = vector.load %arg6[%c0_6, %c0_7] : memref<8x128xf32, #tpu.memory_space<vmem>>, vector<8x128xf32>
    tpu.vector_store %arg6[%c0_6, %c0_7], %7 {strides = array<i32>} : memref<8x128xf32, #tpu.memory_space<vmem>>, vector<8x128xf32>,
    %c0_i32_8 = arith.constant 0 : i32
    %9 = arith.cmpi eq, %arg1, %c0_i32_8 : i32
    %10 = arith.extui %9 : i1 to i32
    %c0_i32_9 = arith.constant 0 : i32
    %11 = arith.cmpi ne, %10, %c0_i32_9 : i32
    scf.if %11 {
      %c0_10 = arith.constant 0 : index
      %c0_11 = arith.constant 0 : index
      %12 = vector.load %arg6[%c0_10, %c0_11] : memref<8x128xf32, #tpu.memory_space<vmem>>, vector<8x128xf32>
      %c0_12 = arith.constant 0 : index
      %c0_13 = arith.constant 0 : index
      %13 = vector.load %arg4[%c0_12, %c0_13] : memref<1x128xf32, #tpu.memory_space<vmem>>, vector<1x128xf32>
      %14 = vector.broadcast %13 : vector<1x128xf32> to vector<8x128xf32>
      %15 = arith.addf %12, %14 : vector<8x128xf32>
      %cst_14 = arith.constant 0.000000e+00 : f32
      %16 = vector.broadcast %cst_14 : f32 to vector<8x128xf32>
      %17 = arith.maximumf %15, %16 : vector<8x128xf32>
      %c0_15 = arith.constant 0 : index
      %c0_16 = arith.constant 0 : index
      %18 = vector.load %arg5[%c0_15, %c0_16] : memref<8x128xf32, #tpu.memory_space<vmem>>, vector<8x128xf32>
      tpu.vector_store %arg5[%c0_15, %c0_16], %17 {strides = array<i32>} : memref<8x128xf32, #tpu.memory_space<vmem>>, vector<8x128xf32>,
    } else {
    }
    return
  }
  func.func @transform_0(%arg0: i32, %arg1: i32) -> (i32, i32) {
    %c0_i32 = arith.constant 0 : i32
    return %arg0, %arg1 : i32, i32
  }
  func.func @transform_1(%arg0: i32, %arg1: i32) -> (i32, i32) {
    %c0_i32 = arith.constant 0 : i32
    %c0_i32_0 = arith.constant 0 : i32
    return %arg1, %c0_i32 : i32, i32
  }
  func.func @transform_2(%arg0: i32, %arg1: i32) -> (i32, i32) {
    %c0_i32 = arith.constant 0 : i32
    %c0_i32_0 = arith.constant 0 : i32
    %c0_i32_1 = arith.constant 0 : i32
    return %c0_i32, %c0_i32_0 : i32, i32
  }
  func.func @transform_3(%arg0: i32, %arg1: i32) -> (i32, i32) {
    %c0_i32 = arith.constant 0 : i32
    %c0_i32_0 = arith.constant 0 : i32
    return %arg0, %c0_i32 : i32, i32
  }
}

</mosaic_0001>

<llo_original>
// kernel: graph_gnn_forward.6
$region0: #{graph_gnn_forward.6}
  #allocation0 [shape = 'u32[]', space=smem, size = 0x4, offset = 0x4, fixed_abs, tag = 'smem constant byte address 0x4 - core index']
  #allocation1 [shape = 'u32[144,128]{1,0:T(1,128)}', space=vmem, size = 0x12000, scoped, tag = 'internal scratch']
  #allocation2 [shape = 'f32[8,128]{1,0:T(8,128)}', space=vmem, size = 0x1000, scoped, tag = 'scratch operand']
  %s0 = inlined_call_operand.vmem [shape: bf16[8,128], index: 0, kind: input, shape index: {}]
  %s1 = inlined_call_operand.vmem [shape: bf16[128,128], index: 1, kind: input, shape index: {}]
  %s2 = inlined_call_operand.vmem [shape: f32[1,128], index: 2, kind: input, shape index: {}]
  %s3 = inlined_call_operand.vmem [shape: f32[8,128], index: 3, kind: output, shape index: {}]
  %s4 = sld [smem:[#allocation0]]
  $region30: #{graph_gnn_forward.6} parent=0
    _
  %s6 = ssub.s32 1, %s4
  %s7 = scalar_select 0, %s6, %s4
  // Predicated region
  $region2: #{graph_gnn_forward.6} parent=0 // pred_check
    _
  $region3: #{graph_gnn_forward.6} parent=0 // pred_check_branch
    %9 = sbr.rel (0) target = $region5
  $region4: #{graph_gnn_forward.6} parent=0 // pred_region
    _
  $region5: #{graph_gnn_forward.6} parent=0 // pred_fallthru
    _
  // Predicated region
  $region6: #{graph_gnn_forward.6} parent=0 // pred_check
    _
  $region7: #{graph_gnn_forward.6} parent=0 // pred_check_branch
    %11 = sbr.rel (0) target = $region9
  $region8: #{graph_gnn_forward.6} parent=0 // pred_region
    _
  $region9: #{graph_gnn_forward.6} parent=0 // pred_fallthru
    _
  // Predicated region
  $region10: #{graph_gnn_forward.6} parent=0 // pred_check
    _
  $region11: #{graph_gnn_forward.6} parent=0 // pred_check_branch
    %13 = sbr.rel (0) target = $region13
  $region12: #{graph_gnn_forward.6} parent=0 // pred_region
    _
  $region13: #{graph_gnn_forward.6} parent=0 // pred_fallthru
    _
  %p15 = scmp.eq.s32.totalorder 0, 0
  // Predicated region
  $region14: #{graph_gnn_forward.6} parent=0 // pred_check
    %p16 = pneg %p15
  $region15: #{graph_gnn_forward.6} parent=0 // pred_check_branch
    %18 = sbr.rel (%p16) target = $region17
  $region16: #{graph_gnn_forward.6} parent=0 // pred_region
    %19 = vst [vmem:[#allocation2] sm:$0xff] 0.0
  $region17: #{graph_gnn_forward.6} parent=0 // pred_fallthru
    _
  %v20 = vld [vmem:[#allocation2] sm:$0xff]
  %v21 = vld [vmem:[%s0] sm:$0xf]
  %v22 = vld [vmem:[%s1] sm:$0xf]
  %v23 = vld [vmem:[%s1 + $0x4] sm:$0xf]
  %v24 = vld [vmem:[%s1 + $0x8] sm:$0xf]
  %v25 = vld [vmem:[%s1 + $0xc] sm:$0xf]
  %v26 = vld [vmem:[%s1 + $0x10] sm:$0xf]
  %v27 = vld [vmem:[%s1 + $0x14] sm:$0xf]
  %v28 = vld [vmem:[%s1 + $0x18] sm:$0xf]
  %v29 = vld [vmem:[%s1 + $0x1c] sm:$0xf]
  %v30 = vld [vmem:[%s1 + $0x20] sm:$0xf]
  %v31 = vld [vmem:[%s1 + $0x24] sm:$0xf]
  %v32 = vld [vmem:[%s1 + $0x28] sm:$0xf]
  %v33 = vld [vmem:[%s1 + $0x2c] sm:$0xf]
  %v34 = vld [vmem:[%s1 + $0x30] sm:$0xf]
  %v35 = vld [vmem:[%s1 + $0x34] sm:$0xf]
  %v36 = vld [vmem:[%s1 + $0x38] sm:$0xf]
  %v37 = vld [vmem:[%s1 + $0x3c] sm:$0xf]
  %v54 = vunpack.c.l.b16 %v22
  %v55 = vunpack.c.l.b16 %v23
  %v56 = vunpack.c.l.b16 %v24
  %v57 = vunpack.c.l.b16 %v25
  %v58 = vunpack.c.l.b16 %v26
  %v59 = vunpack.c.l.b16 %v27
  %v60 = vunpack.c.l.b16 %v28
  %v61 = vunpack.c.l.b16 %v29
  %v62 = vunpack.c.l.b16 %v30
  %v63 = vunpack.c.l.b16 %v31
  %v64 = vunpack.c.l.b16 %v32
  %v65 = vunpack.c.l.b16 %v33
  %v66 = vunpack.c.l.b16 %v34
  %v67 = vunpack.c.l.b16 %v35
  %v68 = vunpack.c.l.b16 %v36
  %v69 = vunpack.c.l.b16 %v37
  %v70 = vpack.c.b16 %v55, %v54
  %v71 = vpack.c.b16 %v57, %v56
  %v72 = vpack.c.b16 %v59, %v58
  %v73 = vpack.c.b16 %v61, %v60
  %v74 = vpack.c.b16 %v63, %v62
  %v75 = vpack.c.b16 %v65, %v64
  %v76 = vpack.c.b16 %v67, %v66
  %v77 = vpack.c.b16 %v69, %v68
  %86 = vmatprep.subr.bf16.mxu0 0
  %87 = vmatpush1.bf16.msra.mxu0 %v77
  %88 = vmatprep.subr.bf16.mxu0 0
  %89 = vmatpush1.bf16.msra.mxu0 %v76
  %90 = vmatprep.subr.bf16.mxu0 0
  %91 = vmatpush1.bf16.msra.mxu0 %v75
  %92 = vmatprep.subr.bf16.mxu0 0
  %93 = vmatpush1.bf16.msra.mxu0 %v74
  %94 = vmatprep.subr.bf16.mxu0 0
  %95 = vmatpush1.bf16.msra.mxu0 %v73
  %96 = vmatprep.subr.bf16.mxu0 0
  %97 = vmatpush1.bf16.msra.mxu0 %v72
  %98 = vmatprep.subr.bf16.mxu0 0
  %99 = vmatpush1.bf16.msra.mxu0 %v71
  %100 = vmatprep.subr.bf16.mxu0 0
  %101 = vmatpush1.bf16.msra.mxu0 %v70
  %102 = vmatprep.subr.bf16.mxu0 0
  %103 = vmatpush2.bf16.msra.mxu0 0
  %104 = vmatprep.subr.bf16.mxu0 0
  %105 = vmatpush2.bf16.msra.mxu0 0
  %106 = vmatprep.subr.bf16.mxu0 0
  %107 = vmatpush2.bf16.msra.mxu0 0
  %108 = vmatprep.subr.bf16.mxu0 0
  %109 = vmatpush2.bf16.msra.mxu0 0
  %110 = vmatprep.subr.bf16.mxu0 0
  %111 = vmatpush2.bf16.msra.mxu0 0
  %112 = vmatprep.subr.bf16.mxu0 0
  %113 = vmatpush2.bf16.msra.mxu0 0
  %114 = vmatprep.subr.bf16.mxu0 0
  %115 = vmatpush2.bf16.msra.mxu0 0
  %116 = vmatprep.subr.bf16.mxu0 0
  %117 = vmatpush2.bf16.msra.mxu0 0
  %118 = vmatprep.mubr.bf16.mxu0 0
  %119 = vmatmul.mubr.bf16.gmra.mxu0 %v21
  %v120 = vpop.f32.mrf.mxu0
  %v121 = vadd.f32 0.0, %v120
  %v122 = vpop.f32.mrf.mxu0
  %v123 = vpop.f32.mrf.mxu0
  %v124 = vpop.f32.mrf.mxu0
  %125 = vdwg.mxu0
  %v126 = vadd.f32 %v20, %v121
  %127 = vst [vmem:[#allocation2] sm:$0xff] %v126
  // Predicated region
  $region18: #{graph_gnn_forward.6} parent=0 // pred_check
    %p128 = pneg %p15
  $region19: #{graph_gnn_forward.6} parent=0 // pred_check_branch
    %130 = sbr.rel (%p128) target = $region21
  $region20: #{graph_gnn_forward.6} parent=0 // pred_region
    %v131 = vld [vmem:[#allocation2] sm:$0xff]
    %v132 = vld [vmem:[%s2] sm:$0x1]
    %v134 = vlaneseq
    %v135 = vshrl.u32 %v134, 7
    %v136 = vsub.s32 0, %v135
    %v137 = vrot.slane %v132, %v136
    %v139 = vadd.f32 %v131, %v137
    %140 = vst [vmem:[%s3] sm:$0xff] %v139
  $region21: #{graph_gnn_forward.6} parent=0 // pred_fallthru
    _
  // Predicated region
  $region22: #{graph_gnn_forward.6} parent=0 // pred_check
    _
  $region23: #{graph_gnn_forward.6} parent=0 // pred_check_branch
    %142 = sbr.rel (0) target = $region25
  $region24: #{graph_gnn_forward.6} parent=0 // pred_region
    _
  $region25: #{graph_gnn_forward.6} parent=0 // pred_fallthru
    _
  // Predicated region
  $region26: #{graph_gnn_forward.6} parent=0 // pred_check
    _
  $region27: #{graph_gnn_forward.6} parent=0 // pred_check_branch
    %144 = sbr.rel (0) target = $region29
  $region28: #{graph_gnn_forward.6} parent=0 // pred_region
    _
  $region29: #{graph_gnn_forward.6} parent=0 // pred_fallthru
    _

// kernel: graph_gnn_forward.7
$region0: #{graph_gnn_forward.7}
  #allocation0 [shape = 'u32[]', space=smem, size = 0x4, offset = 0x4, fixed_abs, tag = 'smem constant byte address 0x4 - core index']
  #allocation1 [shape = 'u32[144,128]{1,0:T(1,128)}', space=vmem, size = 0x12000, scoped, tag = 'internal scratch']
  #allocation2 [shape = 'f32[8,128]{1,0:T(8,128)}', space=vmem, size = 0x1000, scoped, tag = 'scratch operand']
  %s0 = inlined_call_operand.vmem [shape: bf16[8,128], index: 0, kind: input, shape index: {}]
  %s1 = inlined_call_operand.vmem [shape: bf16[128,128], index: 1, kind: input, shape index: {}]
  %s2 = inlined_call_operand.vmem [shape: f32[1,128], index: 2, kind: input, shape index: {}]
  %s3 = inlined_call_operand.vmem [shape: f32[8,128], index: 3, kind: output, shape index: {}]
  %s4 = sld [smem:[#allocation0]]
  $region30: #{graph_gnn_forward.7} parent=0
    _
  %s6 = ssub.s32 1, %s4
  %s7 = scalar_select 0, %s6, %s4
  // Predicated region
  $region2: #{graph_gnn_forward.7} parent=0 // pred_check
    _
  $region3: #{graph_gnn_forward.7} parent=0 // pred_check_branch
    %9 = sbr.rel (0) target = $region5
  $region4: #{graph_gnn_forward.7} parent=0 // pred_region
    _
  $region5: #{graph_gnn_forward.7} parent=0 // pred_fallthru
    _
  // Predicated region
  $region6: #{graph_gnn_forward.7} parent=0 // pred_check
    _
  $region7: #{graph_gnn_forward.7} parent=0 // pred_check_branch
    %11 = sbr.rel (0) target = $region9
  $region8: #{graph_gnn_forward.7} parent=0 // pred_region
    _
  $region9: #{graph_gnn_forward.7} parent=0 // pred_fallthru
    _
  // Predicated region
  $region10: #{graph_gnn_forward.7} parent=0 // pred_check
    _
  $region11: #{graph_gnn_forward.7} parent=0 // pred_check_branch
    %13 = sbr.rel (0) target = $region13
  $region12: #{graph_gnn_forward.7} parent=0 // pred_region
    _
  $region13: #{graph_gnn_forward.7} parent=0 // pred_fallthru
    _
  %p15 = scmp.eq.s32.totalorder 0, 0
  // Predicated region
  $region14: #{graph_gnn_forward.7} parent=0 // pred_check
    %p16 = pneg %p15
  $region15: #{graph_gnn_forward.7} parent=0 // pred_check_branch
    %18 = sbr.rel (%p16) target = $region17
  $region16: #{graph_gnn_forward.7} parent=0 // pred_region
    %19 = vst [vmem:[#allocation2] sm:$0xff] 0.0
  $region17: #{graph_gnn_forward.7} parent=0 // pred_fallthru
    _
  %v20 = vld [vmem:[#allocation2] sm:$0xff]
  %v21 = vld [vmem:[%s0] sm:$0xf]
  %v22 = vld [vmem:[%s1] sm:$0xf]
  %v23 = vld [vmem:[%s1 + $0x4] sm:$0xf]
  %v24 = vld [vmem:[%s1 + $0x8] sm:$0xf]
  %v25 = vld [vmem:[%s1 + $0xc] sm:$0xf]
  %v26 = vld [vmem:[%s1 + $0x10] sm:$0xf]
  %v27 = vld [vmem:[%s1 + $0x14] sm:$0xf]
  %v28 = vld [vmem:[%s1 + $0x18] sm:$0xf]
  %v29 = vld [vmem:[%s1 + $0x1c] sm:$0xf]
  %v30 = vld [vmem:[%s1 + $0x20] sm:$0xf]
  %v31 = vld [vmem:[%s1 + $0x24] sm:$0xf]
  %v32 = vld [vmem:[%s1 + $0x28] sm:$0xf]
  %v33 = vld [vmem:[%s1 + $0x2c] sm:$0xf]
  %v34 = vld [vmem:[%s1 + $0x30] sm:$0xf]
  %v35 = vld [vmem:[%s1 + $0x34] sm:$0xf]
  %v36 = vld [vmem:[%s1 + $0x38] sm:$0xf]
  %v37 = vld [vmem:[%s1 + $0x3c] sm:$0xf]
  %v54 = vunpack.c.l.b16 %v22
  %v55 = vunpack.c.l.b16 %v23
  %v56 = vunpack.c.l.b16 %v24
  %v57 = vunpack.c.l.b16 %v25
  %v58 = vunpack.c.l.b16 %v26
  %v59 = vunpack.c.l.b16 %v27
  %v60 = vunpack.c.l.b16 %v28
  %v61 = vunpack.c.l.b16 %v29
  %v62 = vunpack.c.l.b16 %v30
  %v63 = vunpack.c.l.b16 %v31
  %v64 = vunpack.c.l.b16 %v32
  %v65 = vunpack.c.l.b16 %v33
  %v66 = vunpack.c.l.b16 %v34
  %v67 = vunpack.c.l.b16 %v35
  %v68 = vunpack.c.l.b16 %v36
  %v69 = vunpack.c.l.b16 %v37
  %v70 = vpack.c.b16 %v55, %v54
  %v71 = vpack.c.b16 %v57, %v56
  %v72 = vpack.c.b16 %v59, %v58
  %v73 = vpack.c.b16 %v61, %v60
  %v74 = vpack.c.b16 %v63, %v62
  %v75 = vpack.c.b16 %v65, %v64
  %v76 = vpack.c.b16 %v67, %v66
  %v77 = vpack.c.b16 %v69, %v68
  %86 = vmatprep.subr.bf16.mxu0 0
  %87 = vmatpush1.bf16.msra.mxu0 %v77
  %88 = vmatprep.subr.bf16.mxu0 0
  %89 = vmatpush1.bf16.msra.mxu0 %v76
  %90 = vmatprep.subr.bf16.mxu0 0
  %91 = vmatpush1.bf16.msra.mxu0 %v75
  %92 = vmatprep.subr.bf16.mxu0 0
  %93 = vmatpush1.bf16.msra.mxu0 %v74
  %94 = vmatprep.subr.bf16.mxu0 0
  %95 = vmatpush1.bf16.msra.mxu0 %v73
  %96 = vmatprep.subr.bf16.mxu0 0
  %97 = vmatpush1.bf16.msra.mxu0 %v72
  %98 = vmatprep.subr.bf16.mxu0 0
  %99 = vmatpush1.bf16.msra.mxu0 %v71
  %100 = vmatprep.subr.bf16.mxu0 0
  %101 = vmatpush1.bf16.msra.mxu0 %v70
  %102 = vmatprep.subr.bf16.mxu0 0
  %103 = vmatpush2.bf16.msra.mxu0 0
  %104 = vmatprep.subr.bf16.mxu0 0
  %105 = vmatpush2.bf16.msra.mxu0 0
  %106 = vmatprep.subr.bf16.mxu0 0
  %107 = vmatpush2.bf16.msra.mxu0 0
  %108 = vmatprep.subr.bf16.mxu0 0
  %109 = vmatpush2.bf16.msra.mxu0 0
  %110 = vmatprep.subr.bf16.mxu0 0
  %111 = vmatpush2.bf16.msra.mxu0 0
  %112 = vmatprep.subr.bf16.mxu0 0
  %113 = vmatpush2.bf16.msra.mxu0 0
  %114 = vmatprep.subr.bf16.mxu0 0
  %115 = vmatpush2.bf16.msra.mxu0 0
  %116 = vmatprep.subr.bf16.mxu0 0
  %117 = vmatpush2.bf16.msra.mxu0 0
  %118 = vmatprep.mubr.bf16.mxu0 0
  %119 = vmatmul.mubr.bf16.gmra.mxu0 %v21
  %v120 = vpop.f32.mrf.mxu0
  %v121 = vadd.f32 0.0, %v120
  %v122 = vpop.f32.mrf.mxu0
  %v123 = vpop.f32.mrf.mxu0
  %v124 = vpop.f32.mrf.mxu0
  %125 = vdwg.mxu0
  %v126 = vadd.f32 %v20, %v121
  %127 = vst [vmem:[#allocation2] sm:$0xff] %v126
  // Predicated region
  $region18: #{graph_gnn_forward.7} parent=0 // pred_check
    %p128 = pneg %p15
  $region19: #{graph_gnn_forward.7} parent=0 // pred_check_branch
    %130 = sbr.rel (%p128) target = $region21
  $region20: #{graph_gnn_forward.7} parent=0 // pred_region
    %v131 = vld [vmem:[#allocation2] sm:$0xff]
    %v132 = vld [vmem:[%s2] sm:$0x1]
    %v134 = vlaneseq
    %v135 = vshrl.u32 %v134, 7
    %v136 = vsub.s32 0, %v135
    %v137 = vrot.slane %v132, %v136
    %v139 = vadd.f32 %v131, %v137
    %v140 = vmax.f32 %v139, 0.0
    %141 = vst [vmem:[%s3] sm:$0xff] %v140
  $region21: #{graph_gnn_forward.7} parent=0 // pred_fallthru
    _
  // Predicated region
  $region22: #{graph_gnn_forward.7} parent=0 // pred_check
    _
  $region23: #{graph_gnn_forward.7} parent=0 // pred_check_branch
    %143 = sbr.rel (0) target = $region25
  $region24: #{graph_gnn_forward.7} parent=0 // pred_region
    _
  $region25: #{graph_gnn_forward.7} parent=0 // pred_fallthru
    _
  // Predicated region
  $region26: #{graph_gnn_forward.7} parent=0 // pred_check
    _
  $region27: #{graph_gnn_forward.7} parent=0 // pred_check_branch
    %145 = sbr.rel (0) target = $region29
  $region28: #{graph_gnn_forward.7} parent=0 // pred_region
    _
  $region29: #{graph_gnn_forward.7} parent=0 // pred_fallthru
    _

</llo_original>
